<compile_context>
chip_gen: v6e
topology: v6e:2x2x1
jax: 0.10.0
libtpu: 0.0.40
codegen_flags: <defaults>
</compile_context>

<pallas_src>
import math

import jax
import jax.numpy as jnp
from jax.experimental import pallas as pl
from jax.experimental.pallas import tpu as pltpu

# ----------------------------- config (small synthetic sizes) -----------------------------
B = 16           # batch size (number of image/text pairs) -> full (16,128) packed bf16 vreg
IMG_EMB = 256    # image_embedding (ResNet pooled dim in the original, shrunk; lane-aligned)
TXT_EMB = 128    # text_embedding  (BERT [CLS] dim in the original, shrunk; lane-aligned)
PROJ = 128       # ProjectionHead projection_dim (model config; K=128 is MXU-ideal on v5e)
LN_EPS = 1e-5

# Row layout of the packed (8, PROJ) bias / LayerNorm tile.
_IMG_BP, _IMG_BF, _IMG_G, _IMG_B, _TXT_BP, _TXT_BF, _TXT_G, _TXT_B = range(8)


# ----------------------------------- Pallas kernel -----------------------------------
def clip_model_kernel(
    img_ref, txt_ref,              # (B, emb) bf16 pooled encoder features
    wpi_ref, wfi_ref,              # image ProjectionHead matmul weights (bf16)
    wpt_ref, wft_ref,              # text  ProjectionHead matmul weights (bf16)
    vec_ref,                       # (8, PROJ) f32 packed [bp, bf, gamma, beta] x {img, txt}
    scale_ref,                     # (1, 1) logit_scale in SMEM
    loss_ref,                      # out: (1, 1) scalar loss (VMEM)
):
    vecs = vec_ref[...]            # one f32 vreg tile; rows sliced below

    def projection_head(x, wp, wf, bp, bf, gamma, beta):
        # Linear -> GELU -> Linear -> (Dropout = identity) -> +residual -> LayerNorm
        projected = jnp.dot(x, wp, preferred_element_type=jnp.float32) + bp   # bf16 MXU, f32 acc
        h = jax.nn.gelu(projected)                                            # f32 VPU/EUP (tanh)
        h = jnp.dot(h.astype(jnp.bfloat16), wf,
                    preferred_element_type=jnp.float32) + bf
        h = h + projected
        # Fused one-pass LayerNorm statistics: var = E[x^2] - mu^2.
        inv_d = 1.0 / h.shape[-1]
        s1 = jnp.sum(h, axis=-1, keepdims=True)
        s2 = jnp.sum(h * h, axis=-1, keepdims=True)
        mu = s1 * inv_d
        var = s2 * inv_d - mu * mu
        h = (h - mu) * jax.lax.rsqrt(var + LN_EPS)
        return h * gamma + beta                                               # (B, PROJ) f32

    img_emb = projection_head(
        img_ref[...], wpi_ref[...], wfi_ref[...],
        vecs[_IMG_BP:_IMG_BP + 1], vecs[_IMG_BF:_IMG_BF + 1],
        vecs[_IMG_G:_IMG_G + 1], vecs[_IMG_B:_IMG_B + 1])
    txt_emb = projection_head(
        txt_ref[...], wpt_ref[...], wft_ref[...],
        vecs[_TXT_BP:_TXT_BP + 1], vecs[_TXT_BF:_TXT_BF + 1],
        vecs[_TXT_G:_TXT_G + 1], vecs[_TXT_B:_TXT_B + 1])

    # logits_per_image = logit_scale * img_emb @ txt_emb.T
    # f32 x f32 (tiny B x B matmul); contract last dims directly -> no XLU transpose.
    # The reference CLIPLoss applies logit_scale directly (it does NOT exponentiate it).
    scale = scale_ref[0, 0]
    logits = scale * jax.lax.dot_general(
        img_emb, txt_emb,
        dimension_numbers=(((1,), (1,)), ((), ())),
        preferred_element_type=jnp.float32)                                   # (B, B) f32

    n = logits.shape[0]
    rid = jax.lax.broadcasted_iota(jnp.int32, (n, n), 0)
    cid = jax.lax.broadcasted_iota(jnp.int32, (n, n), 1)
    # Diagonal (the "correct" logits) is shared by both CE directions -> extract once.
    diag = jnp.sum(jnp.where(rid == cid, logits, 0.0), axis=1, keepdims=True)  # (B, 1)

    # cross_entropy(logits_per_image, arange(B)): logsumexp over rows (lanes)
    m_row = jnp.max(logits, axis=1, keepdims=True)
    lse_row = jnp.log(jnp.sum(jnp.exp(logits - m_row), axis=1, keepdims=True)) + m_row  # (B,1)
    # cross_entropy(logits_per_text, arange(B)):  logsumexp over columns (sublanes)
    m_col = jnp.max(logits, axis=0, keepdims=True)
    lse_col = jnp.log(jnp.sum(jnp.exp(logits - m_col), axis=0, keepdims=True)) + m_col  # (1,B)

    # total_loss = (mean(lse_row - diag) + mean(lse_col - diag)) / 2
    #            = (sum(lse_row) + sum(lse_col) - 2*sum(diag)) / (2*B)
    total = (jnp.sum(lse_row, axis=0, keepdims=True)
             + jnp.sum(lse_col, axis=1, keepdims=True)
             - 2.0 * jnp.sum(diag, axis=0, keepdims=True))                    # (1, 1)
    loss_ref[...] = total * (0.5 / n)


# ----------------------------------- wrapper -----------------------------------
def clip_model_loss(image_features, text_features, params):
    batch, img_emb = image_features.shape
    _, txt_emb = text_features.shape
    proj = params["img_wp"].shape[1]

    bf16 = jnp.bfloat16
    # Pack the twelve (1, PROJ) bias / LayerNorm vectors into ONE (8, PROJ) f32 tile
    # (one DMA, one unpadded vreg-aligned VMEM buffer instead of 8 padded ones).
    vecs = jnp.concatenate(
        [params["img_bp"], params["img_bf"], params["img_ln_g"], params["img_ln_b"],
         params["txt_bp"], params["txt_bf"], params["txt_ln_g"], params["txt_ln_b"]],
        axis=0)                                                    # (8, PROJ) f32

    # bf16 at the MXU boundary: features + matmul weights travel in bf16 (half the DMA /
    # VMEM traffic); biases, LayerNorm params and all accumulation stay f32.
    args = (
        image_features.astype(bf16), text_features.astype(bf16),
        params["img_wp"].astype(bf16), params["img_wf"].astype(bf16),
        params["txt_wp"].astype(bf16), params["txt_wf"].astype(bf16),
        vecs,
        params["logit_scale"],
    )

    def full(shape):
        return pl.BlockSpec(shape, lambda i: (0,) * len(shape))

    in_specs = [
        full((batch, img_emb)),                               # image features (whole batch)
        full((batch, txt_emb)),                               # text  features (whole batch)
        full((img_emb, proj)), full((proj, proj)),            # img head: wp, wf
        full((txt_emb, proj)), full((proj, proj)),            # txt head: wp, wf
        full((8, proj)),                                      # packed bias / LN vectors
        pl.BlockSpec(memory_space=pltpu.MemorySpace.SMEM),    # logit_scale scalar -> SMEM
    ]

    loss = pl.pallas_call(
        clip_model_kernel,
        out_shape=jax.ShapeDtypeStruct((1, 1), jnp.float32),
        grid=(1,),                                            # single step: B=16 fits in vregs
        in_specs=in_specs,
        out_specs=pl.BlockSpec((1, 1), lambda i: (0, 0)),
        compiler_params=pltpu.CompilerParams(
            dimension_semantics=("arbitrary",),
            # Explicit budget: stays within the default scoped limit of every generation
            # (v7x has 64 MiB physical / 32 MiB default scoped VMEM).
            vmem_limit_bytes=32 * 1024 * 1024),
    )(*args)
    return loss[0, 0]


# ----------------------------------- param init -----------------------------------
def _linear_init(key, d_in, d_out):
    kw, kb = jax.random.split(key)
    lim = 1.0 / math.sqrt(d_in)
    w = jax.random.uniform(kw, (d_in, d_out), jnp.float32, -lim, lim)
    b = jax.random.uniform(kb, (1, d_out), jnp.float32, -lim, lim)
    return w, b


def init_params(key):
    k = jax.random.split(key, 4)
    img_wp, img_bp = _linear_init(k[0], IMG_EMB, PROJ)
    img_wf, img_bf = _linear_init(k[1], PROJ, PROJ)
    txt_wp, txt_bp = _linear_init(k[2], TXT_EMB, PROJ)
    txt_wf, txt_bf = _linear_init(k[3], PROJ, PROJ)
    return {
        "img_wp": img_wp, "img_bp": img_bp, "img_wf": img_wf, "img_bf": img_bf,
        "img_ln_g": jnp.ones((1, PROJ), jnp.float32),
        "img_ln_b": jnp.zeros((1, PROJ), jnp.float32),
        "txt_wp": txt_wp, "txt_bp": txt_bp, "txt_wf": txt_wf, "txt_bf": txt_bf,
        "txt_ln_g": jnp.ones((1, PROJ), jnp.float32),
        "txt_ln_b": jnp.zeros((1, PROJ), jnp.float32),
        # nn.Parameter(torch.tensor(np.log(1/0.07))) -- the reference CLIPLoss uses it
        # directly (no exp) when scaling the logits, so the kernel does the same.
        "logit_scale": jnp.full((1, 1), math.log(1.0 / 0.07), jnp.float32),
    }


if __name__ == "__main__":
    root = jax.random.PRNGKey(0)
    k_img, k_txt, k_params = jax.random.split(root, 3)

    image_features = jax.random.normal(k_img, (B, IMG_EMB), jnp.float32)
    text_features = jax.random.normal(k_txt, (B, TXT_EMB), jnp.float32)
    params = init_params(k_params)

    loss = clip_model_loss(image_features, text_features, params)
    jax.block_until_ready(loss)
    assert loss.shape == () and bool(jnp.isfinite(loss))
    print("KERNEL_OK")
</pallas_src>

<mosaic_0001>
module attributes {stable_mosaic.version = 11 : i64} {
  func.func @clip_model_kernel(%arg0: i32, %arg1: memref<16x256xbf16, #tpu.memory_space<vmem>>, %arg2: memref<16x128xbf16, #tpu.memory_space<vmem>>, %arg3: memref<256x128xbf16, #tpu.memory_space<vmem>>, %arg4: memref<128x128xbf16, #tpu.memory_space<vmem>>, %arg5: memref<128x128xbf16, #tpu.memory_space<vmem>>, %arg6: memref<128x128xbf16, #tpu.memory_space<vmem>>, %arg7: memref<8x128xf32, #tpu.memory_space<vmem>>, %arg8: memref<1x1xf32, #tpu.memory_space<smem>>, %arg9: memref<1x1xf32, #tpu.memory_space<vmem>>) attributes {dimension_semantics = [#tpu.dimension_semantics<arbitrary>], iteration_bounds = array<i64: 1>, scalar_prefetch = 0 : i64, scratch_operands = 0 : i64, tpu.core_type = #tpu.core_type<tc>, window_params = [{pipeline_mode = #tpu.pipeline_mode<synchronous>, transform_indices = @transform_0, window_bounds = array<i64: 16, 256>}, {pipeline_mode = #tpu.pipeline_mode<synchronous>, transform_indices = @transform_1, window_bounds = array<i64: 16, 128>}, {pipeline_mode = #tpu.pipeline_mode<synchronous>, transform_indices = @transform_2, window_bounds = array<i64: 256, 128>}, {pipeline_mode = #tpu.pipeline_mode<synchronous>, transform_indices = @transform_3, window_bounds = array<i64: 128, 128>}, {pipeline_mode = #tpu.pipeline_mode<synchronous>, transform_indices = @transform_4, window_bounds = array<i64: 128, 128>}, {pipeline_mode = #tpu.pipeline_mode<synchronous>, transform_indices = @transform_5, window_bounds = array<i64: 128, 128>}, {pipeline_mode = #tpu.pipeline_mode<synchronous>, transform_indices = @transform_6, window_bounds = array<i64: 8, 128>}, {transform_indices = @transform_7, window_bounds = array<i64: 1, 1>}, {pipeline_mode = #tpu.pipeline_mode<synchronous>, transform_indices = @transform_8, window_bounds = array<i64: 1, 1>}]} {
    %c0 = arith.constant 0 : index
    %c0_0 = arith.constant 0 : index
    %0 = vector.load %arg7[%c0, %c0_0] : memref<8x128xf32, #tpu.memory_space<vmem>>, vector<8x128xf32>
    %c0_1 = arith.constant 0 : index
    %c0_2 = arith.constant 0 : index
    %1 = vector.load %arg1[%c0_1, %c0_2] : memref<16x256xbf16, #tpu.memory_space<vmem>>, vector<16x256xbf16>
    %c0_3 = arith.constant 0 : index
    %c0_4 = arith.constant 0 : index
    %2 = vector.load %arg3[%c0_3, %c0_4] : memref<256x128xbf16, #tpu.memory_space<vmem>>, vector<256x128xbf16>
    %c0_5 = arith.constant 0 : index
    %c0_6 = arith.constant 0 : index
    %3 = vector.load %arg4[%c0_5, %c0_6] : memref<128x128xbf16, #tpu.memory_space<vmem>>, vector<128x128xbf16>
    %4 = vector.extract_strided_slice %0 {offsets = [0, 0], sizes = [1, 128], strides = [1, 1]} : vector<8x128xf32> to vector<1x128xf32>
    %5 = vector.extract_strided_slice %0 {offsets = [1, 0], sizes = [1, 128], strides = [1, 1]} : vector<8x128xf32> to vector<1x128xf32>
    %6 = vector.extract_strided_slice %0 {offsets = [2, 0], sizes = [1, 128], strides = [1, 1]} : vector<8x128xf32> to vector<1x128xf32>
    %7 = vector.extract_strided_slice %0 {offsets = [3, 0], sizes = [1, 128], strides = [1, 1]} : vector<8x128xf32> to vector<1x128xf32>
    %cst = arith.constant dense<0.000000e+00> : vector<16x128xf32>
    %8 = tpu.matmul %1, %2, %cst {dimension_numbers = #tpu.dot_dimension_numbers<[1], [0], [0], [1], [0, 0, 1, 1], [], []>} : vector<16x256xbf16>, vector<256x128xbf16>, vector<16x128xf32> -> vector<16x128xf32>
    %9 = vector.broadcast %4 : vector<1x128xf32> to vector<16x128xf32>
    %10 = arith.addf %8, %9 : vector<16x128xf32>
    %11 = arith.mulf %10, %10 : vector<16x128xf32>
    %12 = arith.mulf %10, %11 : vector<16x128xf32>
    %cst_7 = arith.constant 4.471500e-02 : f32
    %13 = vector.broadcast %cst_7 : f32 to vector<16x128xf32>
    %14 = arith.mulf %13, %12 : vector<16x128xf32>
    %15 = arith.addf %10, %14 : vector<16x128xf32>
    %cst_8 = arith.constant 0.797884583 : f32
    %16 = vector.broadcast %cst_8 : f32 to vector<16x128xf32>
    %17 = arith.mulf %16, %15 : vector<16x128xf32>
    %18 = math.tanh %17 : vector<16x128xf32>
    %cst_9 = arith.constant 1.000000e+00 : f32
    %19 = vector.broadcast %cst_9 : f32 to vector<16x128xf32>
    %20 = arith.addf %19, %18 : vector<16x128xf32>
    %cst_10 = arith.constant 5.000000e-01 : f32
    %21 = vector.broadcast %cst_10 : f32 to vector<16x128xf32>
    %22 = arith.mulf %21, %20 : vector<16x128xf32>
    %23 = arith.mulf %10, %22 : vector<16x128xf32>
    %24 = arith.truncf %23 : vector<16x128xf32> to vector<16x128xbf16>
    %cst_11 = arith.constant dense<0.000000e+00> : vector<16x128xf32>
    %25 = tpu.matmul %24, %3, %cst_11 {dimension_numbers = #tpu.dot_dimension_numbers<[1], [0], [0], [1], [0, 0, 1, 1], [], []>} : vector<16x128xbf16>, vector<128x128xbf16>, vector<16x128xf32> -> vector<16x128xf32>
    %26 = vector.broadcast %5 : vector<1x128xf32> to vector<16x128xf32>
    %27 = arith.addf %25, %26 : vector<16x128xf32>
    %28 = arith.addf %27, %10 : vector<16x128xf32>
    %cst_12 = arith.constant dense<0.000000e+00> : vector<16xf32>
    %29 = vector.multi_reduction <add>, %28, %cst_12 [1] : vector<16x128xf32> to vector<16xf32>
    %30 = vector.shape_cast %29 : vector<16xf32> to vector<16x1xf32>
    %31 = arith.mulf %28, %28 : vector<16x128xf32>
    %cst_13 = arith.constant dense<0.000000e+00> : vector<16xf32>
    %32 = vector.multi_reduction <add>, %31, %cst_13 [1] : vector<16x128xf32> to vector<16xf32>
    %33 = vector.shape_cast %32 : vector<16xf32> to vector<16x1xf32>
    %cst_14 = arith.constant 7.812500e-03 : f32
    %34 = vector.broadcast %cst_14 : f32 to vector<16x1xf32>
    %35 = arith.mulf %30, %34 : vector<16x1xf32>
    %cst_15 = arith.constant 7.812500e-03 : f32
    %36 = vector.broadcast %cst_15 : f32 to vector<16x1xf32>
    %37 = arith.mulf %33, %36 : vector<16x1xf32>
    %38 = arith.mulf %35, %35 : vector<16x1xf32>
    %39 = arith.subf %37, %38 : vector<16x1xf32>
    %40 = vector.broadcast %35 : vector<16x1xf32> to vector<16x128xf32>
    %41 = arith.subf %28, %40 : vector<16x128xf32>
    %cst_16 = arith.constant 9.99999974E-6 : f32
    %42 = vector.broadcast %cst_16 : f32 to vector<16x1xf32>
    %43 = arith.addf %39, %42 : vector<16x1xf32>
    %44 = math.rsqrt %43 : vector<16x1xf32>
    %45 = vector.broadcast %44 : vector<16x1xf32> to vector<16x128xf32>
    %46 = arith.mulf %41, %45 : vector<16x128xf32>
    %47 = vector.broadcast %6 : vector<1x128xf32> to vector<16x128xf32>
    %48 = arith.mulf %46, %47 : vector<16x128xf32>
    %49 = vector.broadcast %7 : vector<1x128xf32> to vector<16x128xf32>
    %50 = arith.addf %48, %49 : vector<16x128xf32>
    %c0_17 = arith.constant 0 : index
    %c0_18 = arith.constant 0 : index
    %51 = vector.load %arg2[%c0_17, %c0_18] : memref<16x128xbf16, #tpu.memory_space<vmem>>, vector<16x128xbf16>
    %c0_19 = arith.constant 0 : index
    %c0_20 = arith.constant 0 : index
    %52 = vector.load %arg5[%c0_19, %c0_20] : memref<128x128xbf16, #tpu.memory_space<vmem>>, vector<128x128xbf16>
    %c0_21 = arith.constant 0 : index
    %c0_22 = arith.constant 0 : index
    %53 = vector.load %arg6[%c0_21, %c0_22] : memref<128x128xbf16, #tpu.memory_space<vmem>>, vector<128x128xbf16>
    %54 = vector.extract_strided_slice %0 {offsets = [4, 0], sizes = [1, 128], strides = [1, 1]} : vector<8x128xf32> to vector<1x128xf32>
    %55 = vector.extract_strided_slice %0 {offsets = [5, 0], sizes = [1, 128], strides = [1, 1]} : vector<8x128xf32> to vector<1x128xf32>
    %56 = vector.extract_strided_slice %0 {offsets = [6, 0], sizes = [1, 128], strides = [1, 1]} : vector<8x128xf32> to vector<1x128xf32>
    %57 = vector.extract_strided_slice %0 {offsets = [7, 0], sizes = [1, 128], strides = [1, 1]} : vector<8x128xf32> to vector<1x128xf32>
    %cst_23 = arith.constant dense<0.000000e+00> : vector<16x128xf32>
    %58 = tpu.matmul %51, %52, %cst_23 {dimension_numbers = #tpu.dot_dimension_numbers<[1], [0], [0], [1], [0, 0, 1, 1], [], []>} : vector<16x128xbf16>, vector<128x128xbf16>, vector<16x128xf32> -> vector<16x128xf32>
    %59 = vector.broadcast %54 : vector<1x128xf32> to vector<16x128xf32>
    %60 = arith.addf %58, %59 : vector<16x128xf32>
    %61 = arith.mulf %60, %60 : vector<16x128xf32>
    %62 = arith.mulf %60, %61 : vector<16x128xf32>
    %cst_24 = arith.constant 4.471500e-02 : f32
    %63 = vector.broadcast %cst_24 : f32 to vector<16x128xf32>
    %64 = arith.mulf %63, %62 : vector<16x128xf32>
    %65 = arith.addf %60, %64 : vector<16x128xf32>
    %cst_25 = arith.constant 0.797884583 : f32
    %66 = vector.broadcast %cst_25 : f32 to vector<16x128xf32>
    %67 = arith.mulf %66, %65 : vector<16x128xf32>
    %68 = math.tanh %67 : vector<16x128xf32>
    %cst_26 = arith.constant 1.000000e+00 : f32
    %69 = vector.broadcast %cst_26 : f32 to vector<16x128xf32>
    %70 = arith.addf %69, %68 : vector<16x128xf32>
    %cst_27 = arith.constant 5.000000e-01 : f32
    %71 = vector.broadcast %cst_27 : f32 to vector<16x128xf32>
    %72 = arith.mulf %71, %70 : vector<16x128xf32>
    %73 = arith.mulf %60, %72 : vector<16x128xf32>
    %74 = arith.truncf %73 : vector<16x128xf32> to vector<16x128xbf16>
    %cst_28 = arith.constant dense<0.000000e+00> : vector<16x128xf32>
    %75 = tpu.matmul %74, %53, %cst_28 {dimension_numbers = #tpu.dot_dimension_numbers<[1], [0], [0], [1], [0, 0, 1, 1], [], []>} : vector<16x128xbf16>, vector<128x128xbf16>, vector<16x128xf32> -> vector<16x128xf32>
    %76 = vector.broadcast %55 : vector<1x128xf32> to vector<16x128xf32>
    %77 = arith.addf %75, %76 : vector<16x128xf32>
    %78 = arith.addf %77, %60 : vector<16x128xf32>
    %cst_29 = arith.constant dense<0.000000e+00> : vector<16xf32>
    %79 = vector.multi_reduction <add>, %78, %cst_29 [1] : vector<16x128xf32> to vector<16xf32>
    %80 = vector.shape_cast %79 : vector<16xf32> to vector<16x1xf32>
    %81 = arith.mulf %78, %78 : vector<16x128xf32>
    %cst_30 = arith.constant dense<0.000000e+00> : vector<16xf32>
    %82 = vector.multi_reduction <add>, %81, %cst_30 [1] : vector<16x128xf32> to vector<16xf32>
    %83 = vector.shape_cast %82 : vector<16xf32> to vector<16x1xf32>
    %cst_31 = arith.constant 7.812500e-03 : f32
    %84 = vector.broadcast %cst_31 : f32 to vector<16x1xf32>
    %85 = arith.mulf %80, %84 : vector<16x1xf32>
    %cst_32 = arith.constant 7.812500e-03 : f32
    %86 = vector.broadcast %cst_32 : f32 to vector<16x1xf32>
    %87 = arith.mulf %83, %86 : vector<16x1xf32>
    %88 = arith.mulf %85, %85 : vector<16x1xf32>
    %89 = arith.subf %87, %88 : vector<16x1xf32>
    %90 = vector.broadcast %85 : vector<16x1xf32> to vector<16x128xf32>
    %91 = arith.subf %78, %90 : vector<16x128xf32>
    %cst_33 = arith.constant 9.99999974E-6 : f32
    %92 = vector.broadcast %cst_33 : f32 to vector<16x1xf32>
    %93 = arith.addf %89, %92 : vector<16x1xf32>
    %94 = math.rsqrt %93 : vector<16x1xf32>
    %95 = vector.broadcast %94 : vector<16x1xf32> to vector<16x128xf32>
    %96 = arith.mulf %91, %95 : vector<16x128xf32>
    %97 = vector.broadcast %56 : vector<1x128xf32> to vector<16x128xf32>
    %98 = arith.mulf %96, %97 : vector<16x128xf32>
    %99 = vector.broadcast %57 : vector<1x128xf32> to vector<16x128xf32>
    %100 = arith.addf %98, %99 : vector<16x128xf32>
    %c0_34 = arith.constant 0 : index
    %c0_35 = arith.constant 0 : index
    %101 = memref.load %arg8[%c0_34, %c0_35] : memref<1x1xf32, #tpu.memory_space<smem>>
    %cst_36 = arith.constant dense<0.000000e+00> : vector<16x16xf32>
    %102 = tpu.matmul %50, %100, %cst_36 {dimension_numbers = #tpu.dot_dimension_numbers<[1], [1], [0], [0], [0, 0, 1, 0], [], []>} : vector<16x128xf32>, vector<16x128xf32>, vector<16x16xf32> -> vector<16x16xf32>
    %103 = vector.broadcast %101 : f32 to vector<16x16xf32>
    %104 = arith.mulf %103, %102 : vector<16x16xf32>
    %105 = tpu.iota {dimensions = array<i32: 0>} : vector<16x16xi32>
    %106 = tpu.iota {dimensions = array<i32: 1>} : vector<16x16xi32>
    %107 = arith.cmpi eq, %105, %106 : vector<16x16xi32>
    %cst_37 = arith.constant 0.000000e+00 : f32
    %108 = vector.broadcast %cst_37 : f32 to vector<16x16xf32>
    %109 = arith.select %107, %104, %108 : vector<16x16xi1>, vector<16x16xf32>
    %cst_38 = arith.constant dense<0.000000e+00> : vector<16xf32>
    %110 = vector.multi_reduction <add>, %109, %cst_38 [1] : vector<16x16xf32> to vector<16xf32>
    %111 = vector.shape_cast %110 : vector<16xf32> to vector<16x1xf32>
    %cst_39 = arith.constant dense<0xFF800000> : vector<16xf32>
    %112 = vector.multi_reduction <maximumf>, %104, %cst_39 [1] : vector<16x16xf32> to vector<16xf32>
    %113 = vector.shape_cast %112 : vector<16xf32> to vector<16x1xf32>
    %114 = vector.broadcast %113 : vector<16x1xf32> to vector<16x16xf32>
    %115 = arith.subf %104, %114 : vector<16x16xf32>
    %116 = math.exp %115 : vector<16x16xf32>
    %cst_40 = arith.constant dense<0.000000e+00> : vector<16xf32>
    %117 = vector.multi_reduction <add>, %116, %cst_40 [1] : vector<16x16xf32> to vector<16xf32>
    %118 = vector.shape_cast %117 : vector<16xf32> to vector<16x1xf32>
    %119 = math.log %118 : vector<16x1xf32>
    %120 = arith.addf %119, %113 : vector<16x1xf32>
    %cst_41 = arith.constant dense<0xFF800000> : vector<16xf32>
    %121 = vector.multi_reduction <maximumf>, %104, %cst_41 [0] : vector<16x16xf32> to vector<16xf32>
    %122 = vector.shape_cast %121 : vector<16xf32> to vector<1x16xf32>
    %123 = vector.broadcast %122 : vector<1x16xf32> to vector<16x16xf32>
    %124 = arith.subf %104, %123 : vector<16x16xf32>
    %125 = math.exp %124 : vector<16x16xf32>
    %cst_42 = arith.constant dense<0.000000e+00> : vector<16xf32>
    %126 = vector.multi_reduction <add>, %125, %cst_42 [0] : vector<16x16xf32> to vector<16xf32>
    %127 = vector.shape_cast %126 : vector<16xf32> to vector<1x16xf32>
    %128 = math.log %127 : vector<1x16xf32>
    %129 = arith.addf %128, %122 : vector<1x16xf32>
    %cst_43 = arith.constant dense<0.000000e+00> : vector<1xf32>
    %130 = vector.multi_reduction <add>, %120, %cst_43 [0] : vector<16x1xf32> to vector<1xf32>
    %131 = vector.shape_cast %130 : vector<1xf32> to vector<1x1xf32>
    %cst_44 = arith.constant dense<0.000000e+00> : vector<1xf32>
    %132 = vector.multi_reduction <add>, %129, %cst_44 [1] : vector<1x16xf32> to vector<1xf32>
    %133 = vector.shape_cast %132 : vector<1xf32> to vector<1x1xf32>
    %134 = arith.addf %131, %133 : vector<1x1xf32>
    %cst_45 = arith.constant dense<0.000000e+00> : vector<1xf32>
    %135 = vector.multi_reduction <add>, %111, %cst_45 [0] : vector<16x1xf32> to vector<1xf32>
    %136 = vector.shape_cast %135 : vector<1xf32> to vector<1x1xf32>
    %cst_46 = arith.constant 2.000000e+00 : f32
    %137 = vector.broadcast %cst_46 : f32 to vector<1x1xf32>
    %138 = arith.mulf %137, %136 : vector<1x1xf32>
    %139 = arith.subf %134, %138 : vector<1x1xf32>
    %cst_47 = arith.constant 3.125000e-02 : f32
    %140 = vector.broadcast %cst_47 : f32 to vector<1x1xf32>
    %141 = arith.mulf %139, %140 : vector<1x1xf32>
    %c0_48 = arith.constant 0 : index
    %c0_49 = arith.constant 0 : index
    %142 = vector.load %arg9[%c0_48, %c0_49] : memref<1x1xf32, #tpu.memory_space<vmem>>, vector<1x1xf32>
    tpu.vector_store %arg9[%c0_48, %c0_49], %141 {strides = array<i32>} : memref<1x1xf32, #tpu.memory_space<vmem>>, vector<1x1xf32>,
    return
  }
  func.func @transform_0(%arg0: i32) -> (i32, i32) {
    %c0_i32 = arith.constant 0 : i32
    %c0_i32_0 = arith.constant 0 : i32
    %c0_i32_1 = arith.constant 0 : i32
    return %c0_i32, %c0_i32_0 : i32, i32
  }
  func.func @transform_1(%arg0: i32) -> (i32, i32) {
    %c0_i32 = arith.constant 0 : i32
    %c0_i32_0 = arith.constant 0 : i32
    %c0_i32_1 = arith.constant 0 : i32
    return %c0_i32, %c0_i32_0 : i32, i32
  }
  func.func @transform_2(%arg0: i32) -> (i32, i32) {
    %c0_i32 = arith.constant 0 : i32
    %c0_i32_0 = arith.constant 0 : i32
    %c0_i32_1 = arith.constant 0 : i32
    return %c0_i32, %c0_i32_0 : i32, i32
  }
  func.func @transform_3(%arg0: i32) -> (i32, i32) {
    %c0_i32 = arith.constant 0 : i32
    %c0_i32_0 = arith.constant 0 : i32
    %c0_i32_1 = arith.constant 0 : i32
    return %c0_i32, %c0_i32_0 : i32, i32
  }
  func.func @transform_4(%arg0: i32) -> (i32, i32) {
    %c0_i32 = arith.constant 0 : i32
    %c0_i32_0 = arith.constant 0 : i32
    %c0_i32_1 = arith.constant 0 : i32
    return %c0_i32, %c0_i32_0 : i32, i32
  }
  func.func @transform_5(%arg0: i32) -> (i32, i32) {
    %c0_i32 = arith.constant 0 : i32
    %c0_i32_0 = arith.constant 0 : i32
    %c0_i32_1 = arith.constant 0 : i32
    return %c0_i32, %c0_i32_0 : i32, i32
  }
  func.func @transform_6(%arg0: i32) -> (i32, i32) {
    %c0_i32 = arith.constant 0 : i32
    %c0_i32_0 = arith.constant 0 : i32
    %c0_i32_1 = arith.constant 0 : i32
    return %c0_i32, %c0_i32_0 : i32, i32
  }
  func.func @transform_7(%arg0: i32) -> (i32, i32) {
    %c0_i32 = arith.constant 0 : i32
    %c0_i32_0 = arith.constant 0 : i32
    %c0_i32_1 = arith.constant 0 : i32
    return %c0_i32, %c0_i32_0 : i32, i32
  }
  func.func @transform_8(%arg0: i32) -> (i32, i32) {
    %c0_i32 = arith.constant 0 : i32
    %c0_i32_0 = arith.constant 0 : i32
    %c0_i32_1 = arith.constant 0 : i32
    return %c0_i32, %c0_i32_0 : i32, i32
  }
}

</mosaic_0001>

<llo_original>
// kernel: tpu_custom_call.1
$region0: #{tpu_custom_call.1}
  #allocation0 [shape = 'u32[]', space=smem, size = 0x4, offset = 0x4, fixed_abs, tag = 'smem constant byte address 0x4 - core index']
  #allocation1 [shape = 'u32[144,128]{1,0:T(1,128)}', space=vmem, size = 0x12000, scoped, tag = 'internal scratch']
  #allocation2 [shape = 'f32[1,1]{1,0:T(1,128)S(6)}', space=smem, size = 0x200, scoped, tag = 'scoped memory for tpu_custom_call.1']
  %s0 = inlined_call_operand.hbm [shape: bf16[16,256], index: 0, kind: input, shape index: {}]
  %s1 = inlined_call_operand.hbm [shape: bf16[16,128], index: 1, kind: input, shape index: {}]
  %s2 = inlined_call_operand.hbm [shape: bf16[256,128], index: 2, kind: input, shape index: {}]
  %s3 = inlined_call_operand.hbm [shape: bf16[128,128], index: 3, kind: input, shape index: {}]
  %s4 = inlined_call_operand.hbm [shape: bf16[128,128], index: 4, kind: input, shape index: {}]
  %s5 = inlined_call_operand.hbm [shape: bf16[128,128], index: 5, kind: input, shape index: {}]
  %s6 = inlined_call_operand.vmem [shape: f32[8,128], index: 6, kind: input, shape index: {}]
  %s7 = inlined_call_operand.<no memory space> [shape: f32[1,1], index: 7, kind: input, shape index: {}]
  %s8 = inlined_call_operand.hbm [shape: f32[1,1], index: 8, kind: output, shape index: {}]
  %s9 = sld [smem:[#allocation0]]
  $region66: #{tpu_custom_call.1} parent=0
    _
  %s11 = ssub.s32 1, %s9
  %s12 = scalar_select 0, %s11, %s9
  %13 = sst [smem:[#allocation2]] %s7
  $region1: #{tpu_custom_call.1} parent=0
    #allocation3 [shape = 'u8[8192]{0}', space=vmem, size = 0x2000, scoped, tag = 'input window, operand 0, single buffered']
    #allocation4 [shape = 's32[1]{0}', space=sflag, size = 0x4, scoped, tag = 'scoped memory for tpu_custom_call.1']
    #allocation5 [shape = 's32[1]{0}', space=sflag, size = 0x4, scoped, tag = 'scoped memory for tpu_custom_call.1']
    #allocation6 [shape = 'u8[4096]{0}', space=vmem, size = 0x1000, scoped, tag = 'input window, operand 1, single buffered']
    #allocation7 [shape = 's32[1]{0}', space=sflag, size = 0x4, scoped, tag = 'scoped memory for tpu_custom_call.1']
    #allocation8 [shape = 'u8[65536]{0}', space=vmem, size = 0x10000, scoped, tag = 'input window, operand 2, single buffered']
    #allocation9 [shape = 'u8[32768]{0}', space=vmem, size = 0x8000, scoped, tag = 'input window, operand 3, single buffered']
    #allocation10 [shape = 's32[1]{0}', space=sflag, size = 0x4, scoped, tag = 'scoped memory for tpu_custom_call.1']
    #allocation11 [shape = 'u8[32768]{0}', space=vmem, size = 0x8000, scoped, tag = 'input window, operand 4, single buffered']
    #allocation12 [shape = 'u8[32768]{0}', space=vmem, size = 0x8000, scoped, tag = 'input window, operand 5, single buffered']
    #allocation13 [shape = 's32[1]{0}', space=sflag, size = 0x4, scoped, tag = 'scoped memory for tpu_custom_call.1']
    #allocation14 [shape = 'u8[512]{0}', space=vmem, size = 0x400, scoped, tag = 'output window, operand 0, single buffered']
    %14 = vsyncpa [#allocation4], 0
    %15 = vsyncpa [#allocation7], 0
    %16 = vsyncpa [#allocation10], 0
    %17 = vsyncpa [#allocation13], 0
    %18 = vsyncpa [#allocation5], 0
    // Predicated region
    $region2: #{tpu_custom_call.1} parent=1 // pred_check
      _
    $region3: #{tpu_custom_call.1} parent=1 // pred_check_branch
      %20 = sbr.rel (0) target = $region5
    $region4: #{tpu_custom_call.1} parent=1 // pred_region
      %s22 = ssub.s32 256, 256
      %23 = vsyncadd [#allocation4], %s22
      %s24 = sshll.u32 [#allocation3], 4
      %s25 = int_to_ptr.vmem [resolvable:$true] %s24
      %30 = dma.hbm_to_vmem [thread:$0]  %s0, 256, %s25, [#allocation4], 128, 128, 8
    $region5: #{tpu_custom_call.1} parent=1 // pred_fallthru
      _
    // Predicated region
    $region6: #{tpu_custom_call.1} parent=1 // pred_check
      _
    $region7: #{tpu_custom_call.1} parent=1 // pred_check_branch
      %32 = sbr.rel (0) target = $region9
    $region8: #{tpu_custom_call.1} parent=1 // pred_region
      %s34 = ssub.s32 128, 128
      %35 = vsyncadd [#allocation7], %s34
      %s36 = sshll.u32 [#allocation6], 4
      %s37 = int_to_ptr.vmem [resolvable:$true] %s36
      %42 = dma.hbm_to_vmem [thread:$0]  %s1, 128, %s37, [#allocation7], 64, 64, 4
    $region9: #{tpu_custom_call.1} parent=1 // pred_fallthru
      _
    // Predicated region
    $region10: #{tpu_custom_call.1} parent=1 // pred_check
      _
    $region11: #{tpu_custom_call.1} parent=1 // pred_check_branch
      %44 = sbr.rel (0) target = $region13
    $region12: #{tpu_custom_call.1} parent=1 // pred_region
      %s46 = ssub.s32 2048, 2048
      %47 = vsyncadd [#allocation7], %s46
      %s48 = sshll.u32 [#allocation8], 4
      %s49 = int_to_ptr.vmem [resolvable:$true] %s48
      %54 = dma.hbm_to_vmem [thread:$0]  %s2, 2048, %s49, [#allocation7], 64, 64, 4
    $region13: #{tpu_custom_call.1} parent=1 // pred_fallthru
      _
    // Predicated region
    $region14: #{tpu_custom_call.1} parent=1 // pred_check
      _
    $region15: #{tpu_custom_call.1} parent=1 // pred_check_branch
      %56 = sbr.rel (0) target = $region17
    $region16: #{tpu_custom_call.1} parent=1 // pred_region
      %s58 = ssub.s32 1024, 1024
      %59 = vsyncadd [#allocation10], %s58
      %s60 = sshll.u32 [#allocation9], 4
      %s61 = int_to_ptr.vmem [resolvable:$true] %s60
      %66 = dma.hbm_to_vmem [thread:$0]  %s3, 1024, %s61, [#allocation10], 64, 64, 4
    $region17: #{tpu_custom_call.1} parent=1 // pred_fallthru
      _
    // Predicated region
    $region18: #{tpu_custom_call.1} parent=1 // pred_check
      _
    $region19: #{tpu_custom_call.1} parent=1 // pred_check_branch
      %68 = sbr.rel (0) target = $region21
    $region20: #{tpu_custom_call.1} parent=1 // pred_region
      %s70 = ssub.s32 1024, 1024
      %71 = vsyncadd [#allocation10], %s70
      %s72 = sshll.u32 [#allocation11], 4
      %s73 = int_to_ptr.vmem [resolvable:$true] %s72
      %78 = dma.hbm_to_vmem [thread:$0]  %s4, 1024, %s73, [#allocation10], 64, 64, 4
    $region21: #{tpu_custom_call.1} parent=1 // pred_fallthru
      _
    // Predicated region
    $region22: #{tpu_custom_call.1} parent=1 // pred_check
      _
    $region23: #{tpu_custom_call.1} parent=1 // pred_check_branch
      %80 = sbr.rel (0) target = $region25
    $region24: #{tpu_custom_call.1} parent=1 // pred_region
      %s82 = ssub.s32 1024, 1024
      %83 = vsyncadd [#allocation13], %s82
      %s84 = sshll.u32 [#allocation12], 4
      %s85 = int_to_ptr.vmem [resolvable:$true] %s84
      %90 = dma.hbm_to_vmem [thread:$0]  %s5, 1024, %s85, [#allocation13], 64, 64, 4
    $region25: #{tpu_custom_call.1} parent=1 // pred_fallthru
      _
    // Predicated region
    $region26: #{tpu_custom_call.1} parent=1 // pred_check
      _
    $region27: #{tpu_custom_call.1} parent=1 // pred_check_branch
      %92 = sbr.rel (0) target = $region29
    $region28: #{tpu_custom_call.1} parent=1 // pred_region
      _
    $region29: #{tpu_custom_call.1} parent=1 // pred_fallthru
      _
    // Predicated region
    $region30: #{tpu_custom_call.1} parent=1 // pred_check
      _
    $region31: #{tpu_custom_call.1} parent=1 // pred_check_branch
      %94 = sbr.rel (0) target = $region33
    $region32: #{tpu_custom_call.1} parent=1 // pred_region
      _
    $region33: #{tpu_custom_call.1} parent=1 // pred_fallthru
      _
    // Predicated region
    $region34: #{tpu_custom_call.1} parent=1 // pred_check
      _
    $region35: #{tpu_custom_call.1} parent=1 // pred_check_branch
      %96 = sbr.rel (0) target = $region37
    $region36: #{tpu_custom_call.1} parent=1 // pred_region
      %97 = dma.done [#allocation4], 256
    $region37: #{tpu_custom_call.1} parent=1 // pred_fallthru
      _
    // Predicated region
    $region38: #{tpu_custom_call.1} parent=1 // pred_check
      _
    $region39: #{tpu_custom_call.1} parent=1 // pred_check_branch
      %99 = sbr.rel (0) target = $region41
    $region40: #{tpu_custom_call.1} parent=1 // pred_region
      %100 = dma.done [#allocation7], 128
    $region41: #{tpu_custom_call.1} parent=1 // pred_fallthru
      _
    // Predicated region
    $region42: #{tpu_custom_call.1} parent=1 // pred_check
      _
    $region43: #{tpu_custom_call.1} parent=1 // pred_check_branch
      %102 = sbr.rel (0) target = $region45
    $region44: #{tpu_custom_call.1} parent=1 // pred_region
      %103 = dma.done [#allocation7], 2048
    $region45: #{tpu_custom_call.1} parent=1 // pred_fallthru
      _
    // Predicated region
    $region46: #{tpu_custom_call.1} parent=1 // pred_check
      _
    $region47: #{tpu_custom_call.1} parent=1 // pred_check_branch
      %105 = sbr.rel (0) target = $region49
    $region48: #{tpu_custom_call.1} parent=1 // pred_region
      %106 = dma.done [#allocation10], 1024
    $region49: #{tpu_custom_call.1} parent=1 // pred_fallthru
      _
    // Predicated region
    $region50: #{tpu_custom_call.1} parent=1 // pred_check
      _
    $region51: #{tpu_custom_call.1} parent=1 // pred_check_branch
      %108 = sbr.rel (0) target = $region53
    $region52: #{tpu_custom_call.1} parent=1 // pred_region
      %109 = dma.done [#allocation10], 1024
    $region53: #{tpu_custom_call.1} parent=1 // pred_fallthru
      _
    // Predicated region
    $region54: #{tpu_custom_call.1} parent=1 // pred_check
      _
    $region55: #{tpu_custom_call.1} parent=1 // pred_check_branch
      %111 = sbr.rel (0) target = $region57
    $region56: #{tpu_custom_call.1} parent=1 // pred_region
      %112 = dma.done [#allocation13], 1024
    $region57: #{tpu_custom_call.1} parent=1 // pred_fallthru
      _
    %v114 = vld [vmem:[%s6] sm:$0xff]
    %v115 = vld [vmem:[#allocation3] sm:$0xff]
    %v116 = vld [vmem:[#allocation3 + $0x8] sm:$0xff]
    %v117 = vld [vmem:[#allocation8] sm:$0xf]
    %v118 = vld [vmem:[#allocation8 + $0x4] sm:$0xf]
    %v119 = vld [vmem:[#allocation8 + $0x8] sm:$0xf]
    %v120 = vld [vmem:[#allocation8 + $0xc] sm:$0xf]
    %v121 = vld [vmem:[#allocation8 + $0x10] sm:$0xf]
    %v122 = vld [vmem:[#allocation8 + $0x14] sm:$0xf]
    %v123 = vld [vmem:[#allocation8 + $0x18] sm:$0xf]
    %v124 = vld [vmem:[#allocation8 + $0x1c] sm:$0xf]
    %v125 = vld [vmem:[#allocation8 + $0x20] sm:$0xf]
    %v126 = vld [vmem:[#allocation8 + $0x24] sm:$0xf]
    %v127 = vld [vmem:[#allocation8 + $0x28] sm:$0xf]
    %v128 = vld [vmem:[#allocation8 + $0x2c] sm:$0xf]
    %v129 = vld [vmem:[#allocation8 + $0x30] sm:$0xf]
    %v130 = vld [vmem:[#allocation8 + $0x34] sm:$0xf]
    %v131 = vld [vmem:[#allocation8 + $0x38] sm:$0xf]
    %v132 = vld [vmem:[#allocation8 + $0x3c] sm:$0xf]
    %v133 = vld [vmem:[#allocation8 + $0x40] sm:$0xf]
    %v134 = vld [vmem:[#allocation8 + $0x44] sm:$0xf]
    %v135 = vld [vmem:[#allocation8 + $0x48] sm:$0xf]
    %v136 = vld [vmem:[#allocation8 + $0x4c] sm:$0xf]
    %v137 = vld [vmem:[#allocation8 + $0x50] sm:$0xf]
    %v138 = vld [vmem:[#allocation8 + $0x54] sm:$0xf]
    %v139 = vld [vmem:[#allocation8 + $0x58] sm:$0xf]
    %v140 = vld [vmem:[#allocation8 + $0x5c] sm:$0xf]
    %v141 = vld [vmem:[#allocation8 + $0x60] sm:$0xf]
    %v142 = vld [vmem:[#allocation8 + $0x64] sm:$0xf]
    %v143 = vld [vmem:[#allocation8 + $0x68] sm:$0xf]
    %v144 = vld [vmem:[#allocation8 + $0x6c] sm:$0xf]
    %v145 = vld [vmem:[#allocation8 + $0x70] sm:$0xf]
    %v146 = vld [vmem:[#allocation8 + $0x74] sm:$0xf]
    %v147 = vld [vmem:[#allocation8 + $0x78] sm:$0xf]
    %v148 = vld [vmem:[#allocation8 + $0x7c] sm:$0xf]
    %v149 = vld [vmem:[#allocation9] sm:$0xf]
    %v150 = vld [vmem:[#allocation9 + $0x4] sm:$0xf]
    %v151 = vld [vmem:[#allocation9 + $0x8] sm:$0xf]
    %v152 = vld [vmem:[#allocation9 + $0xc] sm:$0xf]
    %v153 = vld [vmem:[#allocation9 + $0x10] sm:$0xf]
    %v154 = vld [vmem:[#allocation9 + $0x14] sm:$0xf]
    %v155 = vld [vmem:[#allocation9 + $0x18] sm:$0xf]
    %v156 = vld [vmem:[#allocation9 + $0x1c] sm:$0xf]
    %v157 = vld [vmem:[#allocation9 + $0x20] sm:$0xf]
    %v158 = vld [vmem:[#allocation9 + $0x24] sm:$0xf]
    %v159 = vld [vmem:[#allocation9 + $0x28] sm:$0xf]
    %v160 = vld [vmem:[#allocation9 + $0x2c] sm:$0xf]
    %v161 = vld [vmem:[#allocation9 + $0x30] sm:$0xf]
    %v162 = vld [vmem:[#allocation9 + $0x34] sm:$0xf]
    %v163 = vld [vmem:[#allocation9 + $0x38] sm:$0xf]
    %v164 = vld [vmem:[#allocation9 + $0x3c] sm:$0xf]
    %v165 = vlaneseq
    %v166 = vshrl.u32 %v165, 7
    %v167 = vsub.s32 0, %v166
    %v168 = vrot.slane %v114, %v167
    %v171 = vunpack.c.l.b16 %v115
    %v172 = vunpack.c.h.b16 %v115
    %v173 = vunpack.c.l.b16 %v116
    %v174 = vunpack.c.h.b16 %v116
    %v175 = vpack.c.b16 %v173, %v171
    %v176 = vpack.c.b16 %v174, %v172
    %v211 = vunpack.c.l.b16 %v117
    %v212 = vunpack.c.l.b16 %v118
    %v213 = vunpack.c.l.b16 %v119
    %v214 = vunpack.c.l.b16 %v120
    %v215 = vunpack.c.l.b16 %v121
    %v216 = vunpack.c.l.b16 %v122
    %v217 = vunpack.c.l.b16 %v123
    %v218 = vunpack.c.l.b16 %v124
    %v219 = vunpack.c.l.b16 %v125
    %v220 = vunpack.c.l.b16 %v126
    %v221 = vunpack.c.l.b16 %v127
    %v222 = vunpack.c.l.b16 %v128
    %v223 = vunpack.c.l.b16 %v129
    %v224 = vunpack.c.l.b16 %v130
    %v225 = vunpack.c.l.b16 %v131
    %v226 = vunpack.c.l.b16 %v132
    %v227 = vunpack.c.l.b16 %v133
    %v228 = vunpack.c.l.b16 %v134
    %v229 = vunpack.c.l.b16 %v135
    %v230 = vunpack.c.l.b16 %v136
    %v231 = vunpack.c.l.b16 %v137
    %v232 = vunpack.c.l.b16 %v138
    %v233 = vunpack.c.l.b16 %v139
    %v234 = vunpack.c.l.b16 %v140
    %v235 = vunpack.c.l.b16 %v141
    %v236 = vunpack.c.l.b16 %v142
    %v237 = vunpack.c.l.b16 %v143
    %v238 = vunpack.c.l.b16 %v144
    %v239 = vunpack.c.l.b16 %v145
    %v240 = vunpack.c.l.b16 %v146
    %v241 = vunpack.c.l.b16 %v147
    %v242 = vunpack.c.l.b16 %v148
    %v243 = vpack.c.b16 %v212, %v211
    %v244 = vpack.c.b16 %v214, %v213
    %v245 = vpack.c.b16 %v216, %v215
    %v246 = vpack.c.b16 %v218, %v217
    %v247 = vpack.c.b16 %v220, %v219
    %v248 = vpack.c.b16 %v222, %v221
    %v249 = vpack.c.b16 %v224, %v223
    %v250 = vpack.c.b16 %v226, %v225
    %v251 = vpack.c.b16 %v228, %v227
    %v252 = vpack.c.b16 %v230, %v229
    %v253 = vpack.c.b16 %v232, %v231
    %v254 = vpack.c.b16 %v234, %v233
    %v255 = vpack.c.b16 %v236, %v235
    %v256 = vpack.c.b16 %v238, %v237
    %v257 = vpack.c.b16 %v240, %v239
    %v258 = vpack.c.b16 %v242, %v241
    %275 = vmatprep.subr.bf16.mxu0 0
    %276 = vmatpush1.bf16.msra.mxu0 %v250
    %277 = vmatprep.subr.bf16.mxu0 0
    %278 = vmatpush1.bf16.msra.mxu0 %v249
    %279 = vmatprep.subr.bf16.mxu0 0
    %280 = vmatpush1.bf16.msra.mxu0 %v248
    %281 = vmatprep.subr.bf16.mxu0 0
    %282 = vmatpush1.bf16.msra.mxu0 %v247
    %283 = vmatprep.subr.bf16.mxu0 0
    %284 = vmatpush1.bf16.msra.mxu0 %v246
    %285 = vmatprep.subr.bf16.mxu0 0
    %286 = vmatpush1.bf16.msra.mxu0 %v245
    %287 = vmatprep.subr.bf16.mxu0 0
    %288 = vmatpush1.bf16.msra.mxu0 %v244
    %289 = vmatprep.subr.bf16.mxu0 0
    %290 = vmatpush1.bf16.msra.mxu0 %v243
    %291 = vmatprep.subr.bf16.mxu0 0
    %292 = vmatpush2.bf16.msra.mxu0 %v258
    %293 = vmatprep.subr.bf16.mxu0 0
    %294 = vmatpush2.bf16.msra.mxu0 %v257
    %295 = vmatprep.subr.bf16.mxu0 0
    %296 = vmatpush2.bf16.msra.mxu0 %v256
    %297 = vmatprep.subr.bf16.mxu0 0
    %298 = vmatpush2.bf16.msra.mxu0 %v255
    %299 = vmatprep.subr.bf16.mxu0 0
    %300 = vmatpush2.bf16.msra.mxu0 %v254
    %301 = vmatprep.subr.bf16.mxu0 0
    %302 = vmatpush2.bf16.msra.mxu0 %v253
    %303 = vmatprep.subr.bf16.mxu0 0
    %304 = vmatpush2.bf16.msra.mxu0 %v252
    %305 = vmatprep.subr.bf16.mxu0 0
    %306 = vmatpush2.bf16.msra.mxu0 %v251
    %307 = vmatprep.mubr.bf16.mxu0 %v176
    %308 = vmatmul.mubr.bf16.gmra.mxu0 %v175
    %v309 = vpop.f32.mrf.mxu0
    %v310 = vadd.f32 %v168, %v309
    %v311 = vpop.f32.mrf.mxu0
    %v312 = vpop.f32.mrf.mxu0
    %v313 = vadd.f32 %v168, %v312
    %v314 = vpop.f32.mrf.mxu0
    %315 = vdwg.mxu0
    %v316 = vmul.f32 %v310, %v310
    %v317 = vmul.f32 %v313, %v313
    %v318 = vmul.f32 %v310, %v316
    %v319 = vmul.f32 %v313, %v317
    %v320 = vmul.f32 %v318, 0.044715
    %v321 = vmul.f32 %v319, 0.044715
    %v322 = vadd.f32 %v310, %v320
    %v323 = vadd.f32 %v313, %v321
    %v324 = vmul.f32 %v322, 0.7978846
    %v325 = vmul.f32 %v323, 0.7978846
    %v326 = vtanh.pop %v324
    %v327 = vtanh.pop %v325
    %v328 = vadd.f32 %v326, 1.0
    %v329 = vadd.f32 %v327, 1.0
    %v330 = vmul.f32 %v328, 0.5
    %v331 = vmul.f32 %v329, 0.5
    %v332 = vmul.f32 %v310, %v330
    %v333 = vmul.f32 %v313, %v331
    %v334 = vpack.c.bf16 %v333, %v332
    %v335 = vlaneseq
    %v336 = vshrl.u32 %v335, 7
    %v337 = vsub.s32 1, %v336
    %v338 = vrot.slane %v114, %v337
    %v355 = vunpack.c.l.b16 %v149
    %v356 = vunpack.c.l.b16 %v150
    %v357 = vunpack.c.l.b16 %v151
    %v358 = vunpack.c.l.b16 %v152
    %v359 = vunpack.c.l.b16 %v153
    %v360 = vunpack.c.l.b16 %v154
    %v361 = vunpack.c.l.b16 %v155
    %v362 = vunpack.c.l.b16 %v156
    %v363 = vunpack.c.l.b16 %v157
    %v364 = vunpack.c.l.b16 %v158
    %v365 = vunpack.c.l.b16 %v159
    %v366 = vunpack.c.l.b16 %v160
    %v367 = vunpack.c.l.b16 %v161
    %v368 = vunpack.c.l.b16 %v162
    %v369 = vunpack.c.l.b16 %v163
    %v370 = vunpack.c.l.b16 %v164
    %v371 = vpack.c.b16 %v356, %v355
    %v372 = vpack.c.b16 %v358, %v357
    %v373 = vpack.c.b16 %v360, %v359
    %v374 = vpack.c.b16 %v362, %v361
    %v375 = vpack.c.b16 %v364, %v363
    %v376 = vpack.c.b16 %v366, %v365
    %v377 = vpack.c.b16 %v368, %v367
    %v378 = vpack.c.b16 %v370, %v369
    %387 = vmatprep.subr.bf16.mxu0 0
    %388 = vmatpush1.bf16.msra.mxu0 %v378
    %389 = vmatprep.subr.bf16.mxu0 0
    %390 = vmatpush1.bf16.msra.mxu0 %v377
    %391 = vmatprep.subr.bf16.mxu0 0
    %392 = vmatpush1.bf16.msra.mxu0 %v376
    %393 = vmatprep.subr.bf16.mxu0 0
    %394 = vmatpush1.bf16.msra.mxu0 %v375
    %395 = vmatprep.subr.bf16.mxu0 0
    %396 = vmatpush1.bf16.msra.mxu0 %v374
    %397 = vmatprep.subr.bf16.mxu0 0
    %398 = vmatpush1.bf16.msra.mxu0 %v373
    %399 = vmatprep.subr.bf16.mxu0 0
    %400 = vmatpush1.bf16.msra.mxu0 %v372
    %401 = vmatprep.subr.bf16.mxu0 0
    %402 = vmatpush1.bf16.msra.mxu0 %v371
    %403 = vmatprep.subr.bf16.mxu0 0
    %404 = vmatpush2.bf16.msra.mxu0 0
    %405 = vmatprep.subr.bf16.mxu0 0
    %406 = vmatpush2.bf16.msra.mxu0 0
    %407 = vmatprep.subr.bf16.mxu0 0
    %408 = vmatpush2.bf16.msra.mxu0 0
    %409 = vmatprep.subr.bf16.mxu0 0
    %410 = vmatpush2.bf16.msra.mxu0 0
    %411 = vmatprep.subr.bf16.mxu0 0
    %412 = vmatpush2.bf16.msra.mxu0 0
    %413 = vmatprep.subr.bf16.mxu0 0
    %414 = vmatpush2.bf16.msra.mxu0 0
    %415 = vmatprep.subr.bf16.mxu0 0
    %416 = vmatpush2.bf16.msra.mxu0 0
    %417 = vmatprep.subr.bf16.mxu0 0
    %418 = vmatpush2.bf16.msra.mxu0 0
    %419 = vmatprep.mubr.bf16.mxu0 0
    %420 = vmatmul.mubr.bf16.gmra.mxu0 %v334
    %v421 = vpop.f32.mrf.mxu0
    %v422 = vadd.f32 %v338, %v421
    %v423 = vpop.f32.mrf.mxu0
    %v424 = vpop.f32.mrf.mxu0
    %v425 = vadd.f32 %v338, %v424
    %v426 = vpop.f32.mrf.mxu0
    %427 = vdwg.mxu0
    %v428 = vadd.f32 %v422, %v310
    %v429 = vadd.f32 %v425, %v313
    %430 = vadd.xlane.f32.xlu0 %v428
    %v431 = vpop.xlane.xlu0 %430
    %432 = vadd.xlane.f32.xlu0 %v429
    %v433 = vpop.xlane.xlu0 %432
    %v434 = vmul.f32 %v428, %v428
    %v435 = vmul.f32 %v429, %v429
    %436 = vadd.xlane.f32.xlu0 %v434
    %v437 = vpop.xlane.xlu0 %436
    %438 = vadd.xlane.f32.xlu0 %v435
    %v439 = vpop.xlane.xlu0 %438
    %v440 = vmul.f32 %v431, 0.0078125
    %v441 = vmul.f32 %v433, 0.0078125
    %v442 = vmul.f32 %v437, 0.0078125
    %v443 = vmul.f32 %v439, 0.0078125
    %v444 = vmul.f32 %v440, %v440
    %v445 = vmul.f32 %v441, %v441
    %v446 = vsub.f32 %v442, %v444
    %v447 = vsub.f32 %v443, %v445
    %v448 = vsub.f32 %v428, %v440
    %v449 = vsub.f32 %v429, %v441
    %v450 = vadd.f32 %v446, 1e-05
    %v451 = vadd.f32 %v447, 1e-05
    %v452 = vrsqrt.pop %v450
    %v453 = vrsqrt.pop %v451
    %v454 = vmul.f32 %v448, %v452
    %v455 = vmul.f32 %v449, %v453
    %v456 = vlaneseq
    %v457 = vshrl.u32 %v456, 7
    %v458 = vsub.s32 2, %v457
    %v459 = vrot.slane %v114, %v458
    %v460 = vmul.f32 %v454, %v459
    %v461 = vmul.f32 %v455, %v459
    %v462 = vlaneseq
    %v463 = vshrl.u32 %v462, 7
    %v464 = vsub.s32 3, %v463
    %v465 = vrot.slane %v114, %v464
    %v466 = vadd.f32 %v460, %v465
    %v467 = vadd.f32 %v461, %v465
    %v468 = vld [vmem:[#allocation6] sm:$0xf]
    %v469 = vld [vmem:[#allocation6 + $0x4] sm:$0xf]
    %v470 = vld [vmem:[#allocation11] sm:$0xf]
    %v471 = vld [vmem:[#allocation11 + $0x4] sm:$0xf]
    %v472 = vld [vmem:[#allocation11 + $0x8] sm:$0xf]
    %v473 = vld [vmem:[#allocation11 + $0xc] sm:$0xf]
    %v474 = vld [vmem:[#allocation11 + $0x10] sm:$0xf]
    %v475 = vld [vmem:[#allocation11 + $0x14] sm:$0xf]
    %v476 = vld [vmem:[#allocation11 + $0x18] sm:$0xf]
    %v477 = vld [vmem:[#allocation11 + $0x1c] sm:$0xf]
    %v478 = vld [vmem:[#allocation11 + $0x20] sm:$0xf]
    %v479 = vld [vmem:[#allocation11 + $0x24] sm:$0xf]
    %v480 = vld [vmem:[#allocation11 + $0x28] sm:$0xf]
    %v481 = vld [vmem:[#allocation11 + $0x2c] sm:$0xf]
    %v482 = vld [vmem:[#allocation11 + $0x30] sm:$0xf]
    %v483 = vld [vmem:[#allocation11 + $0x34] sm:$0xf]
    %v484 = vld [vmem:[#allocation11 + $0x38] sm:$0xf]
    %v485 = vld [vmem:[#allocation11 + $0x3c] sm:$0xf]
    %v486 = vld [vmem:[#allocation12] sm:$0xf]
    %v487 = vld [vmem:[#allocation12 + $0x4] sm:$0xf]
    %v488 = vld [vmem:[#allocation12 + $0x8] sm:$0xf]
    %v489 = vld [vmem:[#allocation12 + $0xc] sm:$0xf]
    %v490 = vld [vmem:[#allocation12 + $0x10] sm:$0xf]
    %v491 = vld [vmem:[#allocation12 + $0x14] sm:$0xf]
    %v492 = vld [vmem:[#allocation12 + $0x18] sm:$0xf]
    %v493 = vld [vmem:[#allocation12 + $0x1c] sm:$0xf]
    %v494 = vld [vmem:[#allocation12 + $0x20] sm:$0xf]
    %v495 = vld [vmem:[#allocation12 + $0x24] sm:$0xf]
    %v496 = vld [vmem:[#allocation12 + $0x28] sm:$0xf]
    %v497 = vld [vmem:[#allocation12 + $0x2c] sm:$0xf]
    %v498 = vld [vmem:[#allocation12 + $0x30] sm:$0xf]
    %v499 = vld [vmem:[#allocation12 + $0x34] sm:$0xf]
    %v500 = vld [vmem:[#allocation12 + $0x38] sm:$0xf]
    %v501 = vld [vmem:[#allocation12 + $0x3c] sm:$0xf]
    %v502 = vlaneseq
    %v503 = vshrl.u32 %v502, 7
    %v504 = vsub.s32 4, %v503
    %v505 = vrot.slane %v114, %v504
    %v508 = vunpack.c.l.b16 %v468
    %v509 = vunpack.c.l.b16 %v469
    %v510 = vpack.c.b16 %v509, %v508
    %v528 = vunpack.c.l.b16 %v470
    %v529 = vunpack.c.l.b16 %v471
    %v530 = vunpack.c.l.b16 %v472
    %v531 = vunpack.c.l.b16 %v473
    %v532 = vunpack.c.l.b16 %v474
    %v533 = vunpack.c.l.b16 %v475
    %v534 = vunpack.c.l.b16 %v476
    %v535 = vunpack.c.l.b16 %v477
    %v536 = vunpack.c.l.b16 %v478
    %v537 = vunpack.c.l.b16 %v479
    %v538 = vunpack.c.l.b16 %v480
    %v539 = vunpack.c.l.b16 %v481
    %v540 = vunpack.c.l.b16 %v482
    %v541 = vunpack.c.l.b16 %v483
    %v542 = vunpack.c.l.b16 %v484
    %v543 = vunpack.c.l.b16 %v485
    %v544 = vpack.c.b16 %v529, %v528
    %v545 = vpack.c.b16 %v531, %v530
    %v546 = vpack.c.b16 %v533, %v532
    %v547 = vpack.c.b16 %v535, %v534
    %v548 = vpack.c.b16 %v537, %v536
    %v549 = vpack.c.b16 %v539, %v538
    %v550 = vpack.c.b16 %v541, %v540
    %v551 = vpack.c.b16 %v543, %v542
    %560 = vmatprep.subr.bf16.mxu0 0
    %561 = vmatpush1.bf16.msra.mxu0 %v551
    %562 = vmatprep.subr.bf16.mxu0 0
    %563 = vmatpush1.bf16.msra.mxu0 %v550
    %564 = vmatprep.subr.bf16.mxu0 0
    %565 = vmatpush1.bf16.msra.mxu0 %v549
    %566 = vmatprep.subr.bf16.mxu0 0
    %567 = vmatpush1.bf16.msra.mxu0 %v548
    %568 = vmatprep.subr.bf16.mxu0 0
    %569 = vmatpush1.bf16.msra.mxu0 %v547
    %570 = vmatprep.subr.bf16.mxu0 0
    %571 = vmatpush1.bf16.msra.mxu0 %v546
    %572 = vmatprep.subr.bf16.mxu0 0
    %573 = vmatpush1.bf16.msra.mxu0 %v545
    %574 = vmatprep.subr.bf16.mxu0 0
    %575 = vmatpush1.bf16.msra.mxu0 %v544
    %576 = vmatprep.subr.bf16.mxu0 0
    %577 = vmatpush2.bf16.msra.mxu0 0
    %578 = vmatprep.subr.bf16.mxu0 0
    %579 = vmatpush2.bf16.msra.mxu0 0
    %580 = vmatprep.subr.bf16.mxu0 0
    %581 = vmatpush2.bf16.msra.mxu0 0
    %582 = vmatprep.subr.bf16.mxu0 0
    %583 = vmatpush2.bf16.msra.mxu0 0
    %584 = vmatprep.subr.bf16.mxu0 0
    %585 = vmatpush2.bf16.msra.mxu0 0
    %586 = vmatprep.subr.bf16.mxu0 0
    %587 = vmatpush2.bf16.msra.mxu0 0
    %588 = vmatprep.subr.bf16.mxu0 0
    %589 = vmatpush2.bf16.msra.mxu0 0
    %590 = vmatprep.subr.bf16.mxu0 0
    %591 = vmatpush2.bf16.msra.mxu0 0
    %592 = vmatprep.mubr.bf16.mxu0 0
    %593 = vmatmul.mubr.bf16.gmra.mxu0 %v510
    %v594 = vpop.f32.mrf.mxu0
    %v595 = vadd.f32 %v505, %v594
    %v596 = vpop.f32.mrf.mxu0
    %v597 = vpop.f32.mrf.mxu0
    %v598 = vadd.f32 %v505, %v597
    %v599 = vpop.f32.mrf.mxu0
    %600 = vdwg.mxu0
    %v601 = vmul.f32 %v595, %v595
    %v602 = vmul.f32 %v598, %v598
    %v603 = vmul.f32 %v595, %v601
    %v604 = vmul.f32 %v598, %v602
    %v605 = vmul.f32 %v603, 0.044715
    %v606 = vmul.f32 %v604, 0.044715
    %v607 = vadd.f32 %v595, %v605
    %v608 = vadd.f32 %v598, %v606
    %v609 = vmul.f32 %v607, 0.7978846
    %v610 = vmul.f32 %v608, 0.7978846
    %v611 = vtanh.pop %v609
    %v612 = vtanh.pop %v610
    %v613 = vadd.f32 %v611, 1.0
    %v614 = vadd.f32 %v612, 1.0
    %v615 = vmul.f32 %v613, 0.5
    %v616 = vmul.f32 %v614, 0.5
    %v617 = vmul.f32 %v595, %v615
    %v618 = vmul.f32 %v598, %v616
    %v619 = vpack.c.bf16 %v618, %v617
    %v620 = vlaneseq
    %v621 = vshrl.u32 %v620, 7
    %v622 = vsub.s32 5, %v621
    %v623 = vrot.slane %v114, %v622
    %v640 = vunpack.c.l.b16 %v486
    %v641 = vunpack.c.l.b16 %v487
    %v642 = vunpack.c.l.b16 %v488
    %v643 = vunpack.c.l.b16 %v489
    %v644 = vunpack.c.l.b16 %v490
    %v645 = vunpack.c.l.b16 %v491
    %v646 = vunpack.c.l.b16 %v492
    %v647 = vunpack.c.l.b16 %v493
    %v648 = vunpack.c.l.b16 %v494
    %v649 = vunpack.c.l.b16 %v495
    %v650 = vunpack.c.l.b16 %v496
    %v651 = vunpack.c.l.b16 %v497
    %v652 = vunpack.c.l.b16 %v498
    %v653 = vunpack.c.l.b16 %v499
    %v654 = vunpack.c.l.b16 %v500
    %v655 = vunpack.c.l.b16 %v501
    %v656 = vpack.c.b16 %v641, %v640
    %v657 = vpack.c.b16 %v643, %v642
    %v658 = vpack.c.b16 %v645, %v644
    %v659 = vpack.c.b16 %v647, %v646
    %v660 = vpack.c.b16 %v649, %v648
    %v661 = vpack.c.b16 %v651, %v650
    %v662 = vpack.c.b16 %v653, %v652
    %v663 = vpack.c.b16 %v655, %v654
    %672 = vmatprep.subr.bf16.mxu0 0
    %673 = vmatpush1.bf16.msra.mxu0 %v663
    %674 = vmatprep.subr.bf16.mxu0 0
    %675 = vmatpush1.bf16.msra.mxu0 %v662
    %676 = vmatprep.subr.bf16.mxu0 0
    %677 = vmatpush1.bf16.msra.mxu0 %v661
    %678 = vmatprep.subr.bf16.mxu0 0
    %679 = vmatpush1.bf16.msra.mxu0 %v660
    %680 = vmatprep.subr.bf16.mxu0 0
    %681 = vmatpush1.bf16.msra.mxu0 %v659
    %682 = vmatprep.subr.bf16.mxu0 0
    %683 = vmatpush1.bf16.msra.mxu0 %v658
    %684 = vmatprep.subr.bf16.mxu0 0
    %685 = vmatpush1.bf16.msra.mxu0 %v657
    %686 = vmatprep.subr.bf16.mxu0 0
    %687 = vmatpush1.bf16.msra.mxu0 %v656
    %688 = vmatprep.subr.bf16.mxu0 0
    %689 = vmatpush2.bf16.msra.mxu0 0
    %690 = vmatprep.subr.bf16.mxu0 0
    %691 = vmatpush2.bf16.msra.mxu0 0
    %692 = vmatprep.subr.bf16.mxu0 0
    %693 = vmatpush2.bf16.msra.mxu0 0
    %694 = vmatprep.subr.bf16.mxu0 0
    %695 = vmatpush2.bf16.msra.mxu0 0
    %696 = vmatprep.subr.bf16.mxu0 0
    %697 = vmatpush2.bf16.msra.mxu0 0
    %698 = vmatprep.subr.bf16.mxu0 0
    %699 = vmatpush2.bf16.msra.mxu0 0
    %700 = vmatprep.subr.bf16.mxu0 0
    %701 = vmatpush2.bf16.msra.mxu0 0
    %702 = vmatprep.subr.bf16.mxu0 0
    %703 = vmatpush2.bf16.msra.mxu0 0
    %704 = vmatprep.mubr.bf16.mxu0 0
    %705 = vmatmul.mubr.bf16.gmra.mxu0 %v619
    %v706 = vpop.f32.mrf.mxu0
    %v707 = vadd.f32 %v623, %v706
    %v708 = vpop.f32.mrf.mxu0
    %v709 = vpop.f32.mrf.mxu0
    %v710 = vadd.f32 %v623, %v709
    %v711 = vpop.f32.mrf.mxu0
    %712 = vdwg.mxu0
    %v713 = vadd.f32 %v707, %v595
    %v714 = vadd.f32 %v710, %v598
    %715 = vadd.xlane.f32.xlu0 %v713
    %v716 = vpop.xlane.xlu0 %715
    %717 = vadd.xlane.f32.xlu0 %v714
    %v718 = vpop.xlane.xlu0 %717
    %v719 = vmul.f32 %v713, %v713
    %v720 = vmul.f32 %v714, %v714
    %721 = vadd.xlane.f32.xlu0 %v719
    %v722 = vpop.xlane.xlu0 %721
    %723 = vadd.xlane.f32.xlu0 %v720
    %v724 = vpop.xlane.xlu0 %723
    %v725 = vmul.f32 %v716, 0.0078125
    %v726 = vmul.f32 %v718, 0.0078125
    %v727 = vmul.f32 %v722, 0.0078125
    %v728 = vmul.f32 %v724, 0.0078125
    %v729 = vmul.f32 %v725, %v725
    %v730 = vmul.f32 %v726, %v726
    %v731 = vsub.f32 %v727, %v729
    %v732 = vsub.f32 %v728, %v730
    %v733 = vsub.f32 %v713, %v725
    %v734 = vsub.f32 %v714, %v726
    %v735 = vadd.f32 %v731, 1e-05
    %v736 = vadd.f32 %v732, 1e-05
    %v737 = vrsqrt.pop %v735
    %v738 = vrsqrt.pop %v736
    %v739 = vmul.f32 %v733, %v737
    %v740 = vmul.f32 %v734, %v738
    %v741 = vlaneseq
    %v742 = vshrl.u32 %v741, 7
    %v743 = vsub.s32 6, %v742
    %v744 = vrot.slane %v114, %v743
    %v745 = vmul.f32 %v739, %v744
    %v746 = vmul.f32 %v740, %v744
    %v747 = vlaneseq
    %v748 = vshrl.u32 %v747, 7
    %v749 = vsub.s32 7, %v748
    %v750 = vrot.slane %v114, %v749
    %v751 = vadd.f32 %v745, %v750
    %v752 = vadd.f32 %v746, %v750
    %s753 = sld [smem:[#allocation2]]
    %754 = vmatprep.subr.mxu0 0.0
    %755 = vmatpush1.xpose.msra.mxu0 0.0
    %756 = vmatprep.subr.mxu0 0.0
    %757 = vmatpush1.xpose.msra.mxu0 0.0
    %758 = vmatprep.subr.mxu0 0.0
    %759 = vmatpush1.xpose.msra.mxu0 0.0
    %760 = vmatprep.subr.mxu0 0.0
    %761 = vmatpush1.xpose.msra.mxu0 0.0
    %762 = vmatprep.subr.mxu0 0.0
    %763 = vmatpush1.xpose.msra.mxu0 0.0
    %764 = vmatprep.subr.mxu0 0.0
    %765 = vmatpush1.xpose.msra.mxu0 0.0
    %766 = vmatprep.subr.mxu0 0.0
    %767 = vmatpush1.xpose.msra.mxu0 0.0
    %768 = vmatprep.subr.mxu0 0.0
    %769 = vmatpush1.xpose.msra.mxu0 0.0
    %770 = vmatprep.subr.mxu0 0.0
    %771 = vmatpush1.xpose.msra.mxu0 0.0
    %772 = vmatprep.subr.mxu0 0.0
    %773 = vmatpush1.xpose.msra.mxu0 0.0
    %774 = vmatprep.subr.mxu0 0.0
    %775 = vmatpush1.xpose.msra.mxu0 0.0
    %776 = vmatprep.subr.mxu0 0.0
    %777 = vmatpush1.xpose.msra.mxu0 0.0
    %778 = vmatprep.subr.mxu0 0.0
    %779 = vmatpush1.xpose.msra.mxu0 0.0
    %780 = vmatprep.subr.mxu0 0.0
    %781 = vmatpush1.xpose.msra.mxu0 0.0
    %782 = vmatprep.subr.mxu0 0.0
    %783 = vmatpush1.xpose.msra.mxu0 %v752
    %784 = vmatprep.subr.mxu0 0.0
    %785 = vmatpush1.xpose.msra.mxu0 %v751
    %786 = vmatprep.subr.mxu0 0.0
    %787 = vmatpush2.xpose.msra.mxu0 0.0
    %788 = vmatprep.subr.mxu0 0.0
    %789 = vmatpush2.xpose.msra.mxu0 0.0
    %790 = vmatprep.subr.mxu0 0.0
    %791 = vmatpush2.xpose.msra.mxu0 0.0
    %792 = vmatprep.subr.mxu0 0.0
    %793 = vmatpush2.xpose.msra.mxu0 0.0
    %794 = vmatprep.subr.mxu0 0.0
    %795 = vmatpush2.xpose.msra.mxu0 0.0
    %796 = vmatprep.subr.mxu0 0.0
    %797 = vmatpush2.xpose.msra.mxu0 0.0
    %798 = vmatprep.subr.mxu0 0.0
    %799 = vmatpush2.xpose.msra.mxu0 0.0
    %800 = vmatprep.subr.mxu0 0.0
    %801 = vmatpush2.xpose.msra.mxu0 0.0
    %802 = vmatprep.subr.mxu0 0.0
    %803 = vmatpush2.xpose.msra.mxu0 0.0
    %804 = vmatprep.subr.mxu0 0.0
    %805 = vmatpush2.xpose.msra.mxu0 0.0
    %806 = vmatprep.subr.mxu0 0.0
    %807 = vmatpush2.xpose.msra.mxu0 0.0
    %808 = vmatprep.subr.mxu0 0.0
    %809 = vmatpush2.xpose.msra.mxu0 0.0
    %810 = vmatprep.subr.mxu0 0.0
    %811 = vmatpush2.xpose.msra.mxu0 0.0
    %812 = vmatprep.subr.mxu0 0.0
    %813 = vmatpush2.xpose.msra.mxu0 0.0
    %814 = vmatprep.subr.mxu0 0.0
    %815 = vmatpush2.xpose.msra.mxu0 0.0
    %816 = vmatprep.subr.mxu0 0.0
    %817 = vmatpush2.xpose.msra.mxu0 0.0
    %818 = vmatprep.mubr.f32.mxu0 0.0
    %819 = vmatmul.mubr.f32.gmra.mxu0 %v466
    %v820 = vpop.f32.mrf.mxu0
    %v821 = vadd.f32 0.0, %v820
    %v822 = vpop.f32.mrf.mxu0
    %823 = vmatprep.mubr.f32.mxu0 0.0
    %824 = vmatmul.mubr.f32.gmra.mxu0 %v467
    %v825 = vpop.f32.mrf.mxu0
    %v826 = vadd.f32 0.0, %v825
    %v827 = vpop.f32.mrf.mxu0
    %828 = vdwg.mxu0
    %v829 = vstv %s753
    %v830 = vmul.f32 %v829, %v821
    %v831 = vmul.f32 %v829, %v826
    %v832 = vlaneseq
    %v833 = vshrl.u32 %v832, 7
    %v834 = vadd.s32 %v833, 8
    %v835 = vlaneseq
    %v836 = vand.u32 %v835, 127
    %vm837 = vcmp.eq.s32.totalorder %v833, %v836
    %vm838 = vcmp.eq.s32.totalorder %v834, %v836
    %v839 = vsel %vm837, %v830, 0.0
    %v840 = vsel %vm838, %v831, 0.0
    %vm841 = vcmask 130048
    %v842 = vsel %vm841, %v839, 0.0
    %843 = vadd.xlane.f32.xlu0 %v842
    %v844 = vpop.xlane.xlu0 %843
    %v845 = vsel %vm841, %v840, 0.0
    %846 = vadd.xlane.f32.xlu0 %v845
    %v847 = vpop.xlane.xlu0 %846
    %v848 = vsel %vm841, %v830, -inf
    %849 = vmax.xlane.f32.xlu0 %v848
    %v850 = vpop.xlane.xlu0 %849
    %v851 = vsel %vm841, %v831, -inf
    %852 = vmax.xlane.f32.xlu0 %v851
    %v853 = vpop.xlane.xlu0 %852
    %v854 = vsub.f32 %v830, %v850
    %v855 = vsub.f32 %v831, %v853
    %v856 = vmul.f32 %v854, 1.442695
    %v857 = vpow.pop %v856
    %v858 = vmul.f32 %v855, 1.442695
    %v859 = vpow.pop %v858
    %v860 = vsel %vm841, %v857, 0.0
    %861 = vadd.xlane.f32.xlu0 %v860
    %v862 = vpop.xlane.xlu0 %861
    %v863 = vsel %vm841, %v859, 0.0
    %864 = vadd.xlane.f32.xlu0 %v863
    %v865 = vpop.xlane.xlu0 %864
    %v866 = vlog2.pop %v862
    %v867 = vmul.f32 %v866, 0.6931472
    %v868 = vlog2.pop %v865
    %v869 = vmul.f32 %v868, 0.6931472
    %v870 = vadd.f32 %v867, %v850
    %v871 = vadd.f32 %v869, %v853
    %v872 = vmax.f32 %v848, %v851
    %v873 = vrot.slane %v872, 4
    %v874 = vmax.f32 %v872, %v873
    %v875 = vrot.slane %v874, 2
    %v876 = vmax.f32 %v874, %v875
    %v877 = vrot.slane %v876, 1
    %v878 = vmax.f32 %v876, %v877
    %v879 = vsub.f32 %v830, %v878
    %v880 = vsub.f32 %v831, %v878
    %v881 = vmul.f32 %v879, 1.442695
    %v882 = vpow.pop %v881
    %v883 = vmul.f32 %v880, 1.442695
    %v884 = vpow.pop %v883
    %v885 = vsel %vm841, %v882, 0.0
    %v886 = vsel %vm841, %v884, 0.0
    %v887 = vadd.f32 %v885, %v886
    %v888 = vrot.slane %v887, 4
    %v889 = vadd.f32 %v887, %v888
    %v890 = vrot.slane %v889, 2
    %v891 = vadd.f32 %v889, %v890
    %v892 = vrot.slane %v891, 1
    %v893 = vadd.f32 %v891, %v892
    %v894 = vlog2.pop %v893
    %v895 = vmul.f32 %v894, 0.6931472
    %v896 = vadd.f32 %v895, %v878
    %v897 = vadd.f32 %v870, %v871
    %v898 = vrot.slane %v897, 4
    %v899 = vadd.f32 %v897, %v898
    %v900 = vrot.slane %v899, 2
    %v901 = vadd.f32 %v899, %v900
    %v902 = vrot.slane %v901, 1
    %v903 = vadd.f32 %v901, %v902
    %v904 = vsel %vm841, %v896, 0.0
    %905 = vadd.xlane.f32.xlu0 %v904
    %v906 = vpop.xlane.xlu0 %905
    %v907 = vadd.f32 %v903, %v906
    %v908 = vadd.f32 %v844, %v847
    %v909 = vrot.slane %v908, 4
    %v910 = vadd.f32 %v908, %v909
    %v911 = vrot.slane %v910, 2
    %v912 = vadd.f32 %v910, %v911
    %v913 = vrot.slane %v912, 1
    %v914 = vadd.f32 %v912, %v913
    %v915 = vmul.f32 %v914, 2.0
    %v916 = vsub.f32 %v907, %v915
    %v917 = vmul.f32 %v916, 0.03125
    %vm918 = vcmask 0
    %919 = vst.msk [vmem:[#allocation14] sm:$0x1] %vm918, %v917
    // Predicated region
    $region58: #{tpu_custom_call.1} parent=1 // pred_check
      _
    $region59: #{tpu_custom_call.1} parent=1 // pred_check_branch
      %921 = sbr.rel (0) target = $region61
    $region60: #{tpu_custom_call.1} parent=1 // pred_region
      %s923 = ssub.s32 16, 16
      %924 = vsyncadd [#allocation5], %s923
      %s926 = sshll.u32 [#allocation14], 4
      %s927 = int_to_ptr.vmem [resolvable:$true] %s926
      %929 = dma.vmem_to_hbm [thread:$0]  %s927, 16, %s8, [#allocation5]
    $region61: #{tpu_custom_call.1} parent=1 // pred_fallthru
      _
    // Predicated region
    $region62: #{tpu_custom_call.1} parent=1 // pred_check
      _
    $region63: #{tpu_custom_call.1} parent=1 // pred_check_branch
      %931 = sbr.rel (0) target = $region65
    $region64: #{tpu_custom_call.1} parent=1 // pred_region
      %932 = dma.done [#allocation5], 16
    $region65: #{tpu_custom_call.1} parent=1 // pred_fallthru
      _
    %933 = vsyncpa [#allocation4], 1
    %934 = vsyncpa [#allocation7], 1
    %935 = vsyncpa [#allocation10], 1
    %936 = vsyncpa [#allocation13], 1
    %937 = vsyncpa [#allocation5], 1

</llo_original>
